<compile_context>
chip_gen: v7x
topology: tpu7x:2x2x1
jax: 0.10.0
libtpu: 0.0.40
codegen_flags: <defaults>
</compile_context>

<pallas_src>
import functools

import jax
import jax.numpy as jnp
from jax.experimental import pallas as pl
from jax.experimental.pallas import tpu as pltpu


def idm_kernel(gfe_ref, csfe_ref, w1_ref, b1_ref, w2_ref, b2_ref,
               out_ref, acc_ref, *, inv_b):
    i = pl.program_id(0)

    @pl.when(i == 0)
    def _init():
        acc_ref[0] = 0.0

    x = gfe_ref[...]                                   # (TB, E) bf16
    c = csfe_ref[...]                                  # (TB, E) f32
    e = c.shape[1]

    # Fused layer 1: x @ [w1_mu | w1_lv] -> (TB, 256), one MXU pass.
    h = jnp.dot(x, w1_ref[...], preferred_element_type=jnp.float32) + b1_ref[...]
    h = jnp.maximum(h, 0.0).astype(jnp.bfloat16)       # (TB, 256)

    # Fused layer 2: h @ blockdiag(w2_mu, w2_lv) -> (TB, 2E) = [mu | pre-tanh lv].
    y = jnp.dot(h, w2_ref[...], preferred_element_type=jnp.float32) + b2_ref[...]
    mu = y[:, :e]
    logvar = jnp.tanh(y[:, e:])

    # exp(-logvar) multiply instead of divide (EUP exp, single VPU mul).
    per_elem = -(mu - c) ** 2 * jnp.exp(-logvar) - logvar    # (TB, E) f32
    acc_ref[0] += jnp.sum(per_elem)

    @pl.when(i == pl.num_programs(0) - 1)
    def _finalize():
        out_ref[0, 0] = -acc_ref[0] * inv_b


def _pick_tile_b(batch, max_tile=512):
    """Largest multiple-of-8 divisor of `batch` that is <= max_tile (else whole batch)."""
    if batch <= max_tile:
        return batch
    for t in range(max_tile, 7, -8):
        if batch % t == 0:
            return t
    return batch


def idm_forward(gfe, csfe, params, *, max_tile_b=512):
    """params: w1_mu (E,128), b1_mu (1,128), w2_mu (128,E), b2_mu (1,E) and the
    same four for the logvar branch (all float32)."""
    B, E = gfe.shape
    H = params["w1_mu"].shape[1]          # 128

    # --- host-side weight fusion -------------------------------------------
    # Layer 1: concat along output dim -> (E, 2H)
    w1 = jnp.concatenate([params["w1_mu"], params["w1_lv"]], axis=1)
    b1 = jnp.concatenate([params["b1_mu"], params["b1_lv"]], axis=1)          # (1, 2H)
    # Layer 2: block-diagonal -> (2H, 2E)
    zeros = jnp.zeros((H, E), jnp.float32)
    w2 = jnp.concatenate(
        [jnp.concatenate([params["w2_mu"], zeros], axis=1),
         jnp.concatenate([zeros, params["w2_lv"]], axis=1)], axis=0)
    b2 = jnp.concatenate([params["b2_mu"], params["b2_lv"]], axis=1)          # (1, 2E)

    # bf16 MXU operands; biases / csfe / loss math stay f32.
    gfe_bf = gfe.astype(jnp.bfloat16)
    w1_bf = w1.astype(jnp.bfloat16)
    w2_bf = w2.astype(jnp.bfloat16)

    tile_b = _pick_tile_b(B, max_tile_b)
    grid = (B // tile_b,)
    inv_b = 1.0 / float(B)

    # TODO(synk): on v7x a 2-TC split (parallel batch axis + per-core partial
    # sums added in the wrapper) would use the second TensorCore at large B.
    out = pl.pallas_call(
        functools.partial(idm_kernel, inv_b=inv_b),
        out_shape=jax.ShapeDtypeStruct((1, 1), jnp.float32),
        grid_spec=pltpu.PrefetchScalarGridSpec(
            num_scalar_prefetch=0,
            grid=grid,
            in_specs=[
                pl.BlockSpec((tile_b, E), lambda i: (i, 0)),        # gfe (bf16)
                pl.BlockSpec((tile_b, E), lambda i: (i, 0)),        # csfe (f32)
                pl.BlockSpec((E, 2 * H), lambda i: (0, 0)),         # fused W1
                pl.BlockSpec((1, 2 * H), lambda i: (0, 0)),         # fused b1
                pl.BlockSpec((2 * H, 2 * E), lambda i: (0, 0)),     # block-diag W2
                pl.BlockSpec((1, 2 * E), lambda i: (0, 0)),         # fused b2
            ],
            out_specs=pl.BlockSpec((1, 1), lambda i: (0, 0),
                                   memory_space=pltpu.MemorySpace.SMEM),
            scratch_shapes=[pltpu.SMEM((1,), jnp.float32)],
        ),
        compiler_params=pltpu.CompilerParams(
            dimension_semantics=("arbitrary",)),                    # batch is a reduction
    )(gfe_bf, csfe, w1_bf, b1, w2_bf, b2)
    return out[0, 0]


def init_params(key, embed_dim, hidden=128):
    """Deterministic init (PyTorch-style uniform fan-in bounds), stored in f32."""
    def linear(k, fan_in, fan_out):
        kw, kb = jax.random.split(k)
        bound = 1.0 / jnp.sqrt(fan_in)
        w = jax.random.uniform(kw, (fan_in, fan_out), jnp.float32, -bound, bound)
        b = jax.random.uniform(kb, (1, fan_out), jnp.float32, -bound, bound)
        return w, b

    k1, k2, k3, k4 = jax.random.split(key, 4)
    w1_mu, b1_mu = linear(k1, embed_dim, hidden)
    w2_mu, b2_mu = linear(k2, hidden, embed_dim)
    w1_lv, b1_lv = linear(k3, embed_dim, hidden)
    w2_lv, b2_lv = linear(k4, hidden, embed_dim)
    return dict(
        w1_mu=w1_mu, b1_mu=b1_mu, w2_mu=w2_mu, b2_mu=b2_mu,
        w1_lv=w1_lv, b1_lv=b1_lv, w2_lv=w2_lv, b2_lv=b2_lv,
    )


def idm_reference(gfe, csfe, p):
    h_mu = jnp.maximum(gfe @ p["w1_mu"] + p["b1_mu"], 0.0)
    mu = h_mu @ p["w2_mu"] + p["b2_mu"]
    h_lv = jnp.maximum(gfe @ p["w1_lv"] + p["b1_lv"], 0.0)
    logvar = jnp.tanh(h_lv @ p["w2_lv"] + p["b2_lv"])
    per = -(mu - csfe) ** 2 / jnp.exp(logvar) - logvar
    return -1.0 * jnp.mean(jnp.sum(per, axis=1))


if __name__ == "__main__":
    B, E = 8, 32
    key = jax.random.PRNGKey(0)
    kp, kg, kc = jax.random.split(key, 3)

    params = init_params(kp, E)
    gfe = jax.random.normal(kg, (B, E), jnp.float32)
    csfe = jax.random.normal(kc, (B, E), jnp.float32)

    loss = idm_forward(gfe, csfe, params)
    loss = jax.block_until_ready(loss)

    ref = idm_reference(gfe, csfe, params)
    # bf16 MXU operands (f32 accumulation) -> loosened tolerance vs. the f32 reference.
    assert jnp.allclose(loss, ref, rtol=2e-2, atol=2e-2), (loss, ref)
    print("KERNEL_OK")
</pallas_src>

<mosaic_0001>
module attributes {stable_mosaic.version = 11 : i64} {
  func.func @idm_kernel(%arg0: i32, %arg1: memref<8x32xbf16, #tpu.memory_space<vmem>>, %arg2: memref<8x32xf32, #tpu.memory_space<vmem>>, %arg3: memref<32x256xbf16, #tpu.memory_space<vmem>>, %arg4: memref<1x256xf32, #tpu.memory_space<vmem>>, %arg5: memref<256x64xbf16, #tpu.memory_space<vmem>>, %arg6: memref<1x64xf32, #tpu.memory_space<vmem>>, %arg7: memref<1x1xf32, #tpu.memory_space<smem>>, %arg8: memref<1xf32, #tpu.memory_space<smem>>) attributes {dimension_semantics = [#tpu.dimension_semantics<arbitrary>], iteration_bounds = array<i64: 1>, scalar_prefetch = 0 : i64, scratch_operands = 1 : i64, tpu.core_type = #tpu.core_type<tc>, window_params = [{transform_indices = @transform_0, window_bounds = array<i64: 8, 32>}, {transform_indices = @transform_1, window_bounds = array<i64: 8, 32>}, {pipeline_mode = #tpu.pipeline_mode<synchronous>, transform_indices = @transform_2, window_bounds = array<i64: 32, 256>}, {pipeline_mode = #tpu.pipeline_mode<synchronous>, transform_indices = @transform_3, window_bounds = array<i64: 1, 256>}, {pipeline_mode = #tpu.pipeline_mode<synchronous>, transform_indices = @transform_4, window_bounds = array<i64: 256, 64>}, {pipeline_mode = #tpu.pipeline_mode<synchronous>, transform_indices = @transform_5, window_bounds = array<i64: 1, 64>}, {transform_indices = @transform_6, window_bounds = array<i64: 1, 1>}]} {
    %c0_i32 = arith.constant 0 : i32
    %0 = arith.cmpi eq, %arg0, %c0_i32 : i32
    %1 = arith.extui %0 : i1 to i32
    %c0_i32_0 = arith.constant 0 : i32
    %2 = arith.cmpi ne, %1, %c0_i32_0 : i32
    scf.if %2 {
      %cst_21 = arith.constant 0.000000e+00 : f32
      %c0_22 = arith.constant 0 : index
      %40 = memref.load %arg8[%c0_22] : memref<1xf32, #tpu.memory_space<smem>>
      memref.store %cst_21, %arg8[%c0_22] : memref<1xf32, #tpu.memory_space<smem>>
    } else {
    }
    %c0 = arith.constant 0 : index
    %c0_1 = arith.constant 0 : index
    %3 = vector.load %arg1[%c0, %c0_1] : memref<8x32xbf16, #tpu.memory_space<vmem>>, vector<8x32xbf16>
    %c0_2 = arith.constant 0 : index
    %c0_3 = arith.constant 0 : index
    %4 = vector.load %arg2[%c0_2, %c0_3] : memref<8x32xf32, #tpu.memory_space<vmem>>, vector<8x32xf32>
    %c0_4 = arith.constant 0 : index
    %c0_5 = arith.constant 0 : index
    %5 = vector.load %arg3[%c0_4, %c0_5] : memref<32x256xbf16, #tpu.memory_space<vmem>>, vector<32x256xbf16>
    %cst = arith.constant dense<0.000000e+00> : vector<8x256xf32>
    %6 = tpu.matmul %3, %5, %cst {dimension_numbers = #tpu.dot_dimension_numbers<[1], [0], [0], [1], [0, 0, 1, 1], [], []>} : vector<8x32xbf16>, vector<32x256xbf16>, vector<8x256xf32> -> vector<8x256xf32>
    %c0_6 = arith.constant 0 : index
    %c0_7 = arith.constant 0 : index
    %7 = vector.load %arg4[%c0_6, %c0_7] : memref<1x256xf32, #tpu.memory_space<vmem>>, vector<1x256xf32>
    %8 = vector.broadcast %7 : vector<1x256xf32> to vector<8x256xf32>
    %9 = arith.addf %6, %8 : vector<8x256xf32>
    %cst_8 = arith.constant 0.000000e+00 : f32
    %10 = vector.broadcast %cst_8 : f32 to vector<8x256xf32>
    %11 = arith.maximumf %9, %10 : vector<8x256xf32>
    %12 = arith.truncf %11 : vector<8x256xf32> to vector<8x256xbf16>
    %c0_9 = arith.constant 0 : index
    %c0_10 = arith.constant 0 : index
    %13 = vector.load %arg5[%c0_9, %c0_10] : memref<256x64xbf16, #tpu.memory_space<vmem>>, vector<256x64xbf16>
    %cst_11 = arith.constant dense<0.000000e+00> : vector<8x64xf32>
    %14 = tpu.matmul %12, %13, %cst_11 {dimension_numbers = #tpu.dot_dimension_numbers<[1], [0], [0], [1], [0, 0, 1, 1], [], []>} : vector<8x256xbf16>, vector<256x64xbf16>, vector<8x64xf32> -> vector<8x64xf32>
    %c0_12 = arith.constant 0 : index
    %c0_13 = arith.constant 0 : index
    %15 = vector.load %arg6[%c0_12, %c0_13] : memref<1x64xf32, #tpu.memory_space<vmem>>, vector<1x64xf32>
    %16 = vector.broadcast %15 : vector<1x64xf32> to vector<8x64xf32>
    %17 = arith.addf %14, %16 : vector<8x64xf32>
    %18 = vector.extract_strided_slice %17 {offsets = [0, 0], sizes = [8, 32], strides = [1, 1]} : vector<8x64xf32> to vector<8x32xf32>
    %19 = vector.extract_strided_slice %17 {offsets = [0, 32], sizes = [8, 32], strides = [1, 1]} : vector<8x64xf32> to vector<8x32xf32>
    %20 = math.tanh %19 : vector<8x32xf32>
    %21 = arith.subf %18, %4 : vector<8x32xf32>
    %22 = arith.mulf %21, %21 : vector<8x32xf32>
    %cst_14 = arith.constant 0.000000e+00 : f32
    %23 = vector.broadcast %cst_14 : f32 to vector<8x32xf32>
    %24 = arith.subf %23, %22 : vector<8x32xf32>
    %cst_15 = arith.constant 0.000000e+00 : f32
    %25 = vector.broadcast %cst_15 : f32 to vector<8x32xf32>
    %26 = arith.subf %25, %20 : vector<8x32xf32>
    %27 = math.exp %26 : vector<8x32xf32>
    %28 = arith.mulf %24, %27 : vector<8x32xf32>
    %29 = arith.subf %28, %20 : vector<8x32xf32>
    %c0_16 = arith.constant 0 : index
    %30 = memref.load %arg8[%c0_16] : memref<1xf32, #tpu.memory_space<smem>>
    %31 = vector.shape_cast %29 : vector<8x32xf32> to vector<1x8x32xf32>
    %cst_17 = arith.constant dense<0.000000e+00> : vector<1xf32>
    %32 = vector.multi_reduction <add>, %31, %cst_17 [1, 2] : vector<1x8x32xf32> to vector<1xf32>
    %33 = vector.shape_cast %32 : vector<1xf32> to vector<1x1x1xf32>
    %34 = vector.extract %33[0, 0, 0] : f32 from vector<1x1x1xf32>
    %35 = arith.addf %30, %34 : f32
    %c0_18 = arith.constant 0 : index
    %36 = memref.load %arg8[%c0_18] : memref<1xf32, #tpu.memory_space<smem>>
    memref.store %35, %arg8[%c0_18] : memref<1xf32, #tpu.memory_space<smem>>
    %c0_i32_19 = arith.constant 0 : i32
    %37 = arith.cmpi eq, %arg0, %c0_i32_19 : i32
    %38 = arith.extui %37 : i1 to i32
    %c0_i32_20 = arith.constant 0 : i32
    %39 = arith.cmpi ne, %38, %c0_i32_20 : i32
    scf.if %39 {
      %c0_21 = arith.constant 0 : index
      %40 = memref.load %arg8[%c0_21] : memref<1xf32, #tpu.memory_space<smem>>
      %cst_22 = arith.constant 0.000000e+00 : f32
      %41 = arith.subf %cst_22, %40 : f32
      %cst_23 = arith.constant 1.250000e-01 : f32
      %42 = arith.mulf %41, %cst_23 : f32
      %c0_24 = arith.constant 0 : index
      %c0_25 = arith.constant 0 : index
      %43 = memref.load %arg7[%c0_24, %c0_25] : memref<1x1xf32, #tpu.memory_space<smem>>
      memref.store %42, %arg7[%c0_24, %c0_25] : memref<1x1xf32, #tpu.memory_space<smem>>
    } else {
    }
    return
  }
  func.func @transform_0(%arg0: i32) -> (i32, i32) {
    %c0_i32 = arith.constant 0 : i32
    %c0_i32_0 = arith.constant 0 : i32
    return %arg0, %c0_i32 : i32, i32
  }
  func.func @transform_1(%arg0: i32) -> (i32, i32) {
    %c0_i32 = arith.constant 0 : i32
    %c0_i32_0 = arith.constant 0 : i32
    return %arg0, %c0_i32 : i32, i32
  }
  func.func @transform_2(%arg0: i32) -> (i32, i32) {
    %c0_i32 = arith.constant 0 : i32
    %c0_i32_0 = arith.constant 0 : i32
    %c0_i32_1 = arith.constant 0 : i32
    return %c0_i32, %c0_i32_0 : i32, i32
  }
  func.func @transform_3(%arg0: i32) -> (i32, i32) {
    %c0_i32 = arith.constant 0 : i32
    %c0_i32_0 = arith.constant 0 : i32
    %c0_i32_1 = arith.constant 0 : i32
    return %c0_i32, %c0_i32_0 : i32, i32
  }
  func.func @transform_4(%arg0: i32) -> (i32, i32) {
    %c0_i32 = arith.constant 0 : i32
    %c0_i32_0 = arith.constant 0 : i32
    %c0_i32_1 = arith.constant 0 : i32
    return %c0_i32, %c0_i32_0 : i32, i32
  }
  func.func @transform_5(%arg0: i32) -> (i32, i32) {
    %c0_i32 = arith.constant 0 : i32
    %c0_i32_0 = arith.constant 0 : i32
    %c0_i32_1 = arith.constant 0 : i32
    return %c0_i32, %c0_i32_0 : i32, i32
  }
  func.func @transform_6(%arg0: i32) -> (i32, i32) {
    %c0_i32 = arith.constant 0 : i32
    %c0_i32_0 = arith.constant 0 : i32
    %c0_i32_1 = arith.constant 0 : i32
    return %c0_i32, %c0_i32_0 : i32, i32
  }
}

</mosaic_0001>

<llo_original>
// kernel: tpu_custom_call.1
$region0: #{tpu_custom_call.1}
  #allocation0 [shape = 'u32[]', space=smem, size = 0x4, offset = 0x4, fixed_abs, tag = 'smem constant byte address 0x4 - core index']
  #allocation1 [shape = 'u32[144,128]{1,0:T(1,128)}', space=vmem, size = 0x12000, scoped, tag = 'internal scratch']
  #allocation2 [shape = 'f32[1]{0:T(128)}', space=smem, size = 0x200, scoped, tag = 'scratch operand']
  %s0 = inlined_call_operand.vmem [shape: bf16[8,32], index: 0, kind: input, shape index: {}]
  %s1 = inlined_call_operand.vmem [shape: f32[8,32], index: 1, kind: input, shape index: {}]
  %s2 = inlined_call_operand.vmem [shape: bf16[32,256], index: 2, kind: input, shape index: {}]
  %s3 = inlined_call_operand.vmem [shape: f32[1,256], index: 3, kind: input, shape index: {}]
  %s4 = inlined_call_operand.vmem [shape: bf16[256,64], index: 4, kind: input, shape index: {}]
  %s5 = inlined_call_operand.vmem [shape: f32[1,64], index: 5, kind: input, shape index: {}]
  %s6 = inlined_call_operand.hbm [shape: f32[1,1], index: 6, kind: output, shape index: {}]
  %s7 = sld [smem:[#allocation0]]
  $region42: #{tpu_custom_call.1} parent=0
    _
  %s9 = ssub.s32 1, %s7
  %s10 = scalar_select 0, %s9, %s7
  $region1: #{tpu_custom_call.1} parent=0
    #allocation3 [shape = 'u8[512]{0}', space=smem, size = 0x200, scoped, tag = 'output window, operand 0, single buffered']
    #allocation4 [shape = 's32[1]{0}', space=sflag, size = 0x4, scoped, tag = 'scoped memory for tpu_custom_call.1']
    %11 = vsyncpa [#allocation4], 0
    // Predicated region
    $region2: #{tpu_custom_call.1} parent=1 // pred_check
      _
    $region3: #{tpu_custom_call.1} parent=1 // pred_check_branch
      %13 = sbr.rel (0) target = $region5
    $region4: #{tpu_custom_call.1} parent=1 // pred_region
      _
    $region5: #{tpu_custom_call.1} parent=1 // pred_fallthru
      _
    // Predicated region
    $region6: #{tpu_custom_call.1} parent=1 // pred_check
      _
    $region7: #{tpu_custom_call.1} parent=1 // pred_check_branch
      %15 = sbr.rel (0) target = $region9
    $region8: #{tpu_custom_call.1} parent=1 // pred_region
      _
    $region9: #{tpu_custom_call.1} parent=1 // pred_fallthru
      _
    // Predicated region
    $region10: #{tpu_custom_call.1} parent=1 // pred_check
      _
    $region11: #{tpu_custom_call.1} parent=1 // pred_check_branch
      %17 = sbr.rel (0) target = $region13
    $region12: #{tpu_custom_call.1} parent=1 // pred_region
      _
    $region13: #{tpu_custom_call.1} parent=1 // pred_fallthru
      _
    // Predicated region
    $region14: #{tpu_custom_call.1} parent=1 // pred_check
      _
    $region15: #{tpu_custom_call.1} parent=1 // pred_check_branch
      %19 = sbr.rel (0) target = $region17
    $region16: #{tpu_custom_call.1} parent=1 // pred_region
      _
    $region17: #{tpu_custom_call.1} parent=1 // pred_fallthru
      _
    // Predicated region
    $region18: #{tpu_custom_call.1} parent=1 // pred_check
      _
    $region19: #{tpu_custom_call.1} parent=1 // pred_check_branch
      %21 = sbr.rel (0) target = $region21
    $region20: #{tpu_custom_call.1} parent=1 // pred_region
      _
    $region21: #{tpu_custom_call.1} parent=1 // pred_fallthru
      _
    // Predicated region
    $region22: #{tpu_custom_call.1} parent=1 // pred_check
      _
    $region23: #{tpu_custom_call.1} parent=1 // pred_check_branch
      %23 = sbr.rel (0) target = $region25
    $region24: #{tpu_custom_call.1} parent=1 // pred_region
      _
    $region25: #{tpu_custom_call.1} parent=1 // pred_fallthru
      _
    %p25 = scmp.eq.s32.totalorder 0, 0
    // Predicated region
    $region26: #{tpu_custom_call.1} parent=1 // pred_check
      %p26 = pneg %p25
    $region27: #{tpu_custom_call.1} parent=1 // pred_check_branch
      %28 = sbr.rel (%p26) target = $region29
    $region28: #{tpu_custom_call.1} parent=1 // pred_region
      %s29 = scalar_lea.smem [#allocation2], 0
      %30 = sst [smem:[%s29]] 0.0
    $region29: #{tpu_custom_call.1} parent=1 // pred_fallthru
      _
    %v31 = vld [vmem:[%s0] sm:$0xf]
    %v32 = vld [vmem:[%s1] sm:$0xff]
    %v33 = vld [vmem:[%s2] sm:$0xff]
    %v34 = vld [vmem:[%s2 + $0x8] sm:$0xff]
    %v35 = vld [vmem:[%s2 + $0x10] sm:$0xff]
    %v36 = vld [vmem:[%s2 + $0x18] sm:$0xff]
    %v37 = vld [vmem:[%s3] sm:$0x3]
    %v39 = vlaneseq
    %v40 = vshrl.u32 %v39, 7
    %v41 = vsub.s32 0, %v40
    %v42 = vrot.slane %v37, %v41
    %v43 = vlaneseq
    %v44 = vshrl.u32 %v43, 7
    %v45 = vsub.s32 1, %v44
    %v46 = vrot.slane %v37, %v45
    %v53 = vunpack.c.l.b16 %v33
    %v54 = vunpack.c.h.b16 %v33
    %v55 = vunpack.c.l.b16 %v34
    %v56 = vunpack.c.h.b16 %v34
    %v57 = vunpack.c.l.b16 %v35
    %v58 = vunpack.c.h.b16 %v35
    %v59 = vunpack.c.l.b16 %v36
    %v60 = vunpack.c.h.b16 %v36
    %v61 = vpack.c.b16 %v55, %v53
    %v62 = vpack.c.b16 %v56, %v54
    %v63 = vpack.c.b16 %v59, %v57
    %v64 = vpack.c.b16 %v60, %v58
    %vm69 = vcmask 261120
    %v71 = vsel %vm69, %v31, 0
    %73 = vmatprep.subr.bf16.mxu0 %v62
    %74 = vmatpush1.bf16.msra.mxu0 %v61
    %75 = vmatprep.subr.bf16.mxu0 %v64
    %76 = vmatpush1.bf16.msra.mxu0 %v63
    %77 = vmatprep.subr.bf16.mxu0 0
    %78 = vmatpush1.bf16.msra.mxu0 0
    %79 = vmatprep.subr.bf16.mxu0 0
    %80 = vmatpush1.bf16.msra.mxu0 0
    %81 = vmatprep.subr.bf16.mxu0 0
    %82 = vmatpush1.bf16.msra.mxu0 0
    %83 = vmatprep.subr.bf16.mxu0 0
    %84 = vmatpush1.bf16.msra.mxu0 0
    %85 = vmatprep.subr.bf16.mxu0 0
    %86 = vmatpush1.bf16.msra.mxu0 0
    %87 = vmatprep.subr.bf16.mxu0 0
    %88 = vmatpush1.bf16.msra.mxu0 0
    %89 = vmatprep.subr.bf16.mxu0 0
    %90 = vmatpush1.bf16.msra.mxu0 0
    %91 = vmatprep.subr.bf16.mxu0 0
    %92 = vmatpush1.bf16.msra.mxu0 0
    %93 = vmatprep.subr.bf16.mxu0 0
    %94 = vmatpush1.bf16.msra.mxu0 0
    %95 = vmatprep.subr.bf16.mxu0 0
    %96 = vmatpush1.bf16.msra.mxu0 0
    %97 = vmatprep.subr.bf16.mxu0 0
    %98 = vmatpush1.bf16.msra.mxu0 0
    %99 = vmatprep.subr.bf16.mxu0 0
    %100 = vmatpush1.bf16.msra.mxu0 0
    %101 = vmatprep.subr.bf16.mxu0 0
    %102 = vmatpush1.bf16.msra.mxu0 0
    %103 = vmatprep.subr.bf16.mxu0 0
    %104 = vmatpush1.bf16.msra.mxu0 0
    %105 = vmatprep.mubr.bf16.mxu0 0
    %106 = vmatmul.mubr.bf16.gmra.mrb[0].mxu0 %v71
    %v107 = vpop.f32.mrb[0].mxu0
    %v108 = vadd.f32 %v42, %v107
    %v109 = vpop.f32.mrb[0].mxu0
    %v110 = vadd.f32 %v46, %v109
    %v111 = vpop.f32.mrb[0].mxu0
    %v112 = vpop.f32.mrb[0].mxu0
    %113 = vdwg.mxu0
    %v114 = vmax.f32 %v108, 0.0
    %v115 = vmax.f32 %v110, 0.0
    %v116 = vpack.c.bf16 %v114, %v114
    %v117 = vpack.c.bf16 %v115, %v115
    %v118 = vld [vmem:[%s4] sm:$0xf]
    %v119 = vld [vmem:[%s4 + $0x4] sm:$0xf]
    %v120 = vld [vmem:[%s4 + $0x8] sm:$0xf]
    %v121 = vld [vmem:[%s4 + $0xc] sm:$0xf]
    %v122 = vld [vmem:[%s4 + $0x10] sm:$0xf]
    %v123 = vld [vmem:[%s4 + $0x14] sm:$0xf]
    %v124 = vld [vmem:[%s4 + $0x18] sm:$0xf]
    %v125 = vld [vmem:[%s4 + $0x1c] sm:$0xf]
    %v126 = vld [vmem:[%s4 + $0x20] sm:$0xf]
    %v127 = vld [vmem:[%s4 + $0x24] sm:$0xf]
    %v128 = vld [vmem:[%s4 + $0x28] sm:$0xf]
    %v129 = vld [vmem:[%s4 + $0x2c] sm:$0xf]
    %v130 = vld [vmem:[%s4 + $0x30] sm:$0xf]
    %v131 = vld [vmem:[%s4 + $0x34] sm:$0xf]
    %v132 = vld [vmem:[%s4 + $0x38] sm:$0xf]
    %v133 = vld [vmem:[%s4 + $0x3c] sm:$0xf]
    %v134 = vld [vmem:[%s4 + $0x40] sm:$0xf]
    %v135 = vld [vmem:[%s4 + $0x44] sm:$0xf]
    %v136 = vld [vmem:[%s4 + $0x48] sm:$0xf]
    %v137 = vld [vmem:[%s4 + $0x4c] sm:$0xf]
    %v138 = vld [vmem:[%s4 + $0x50] sm:$0xf]
    %v139 = vld [vmem:[%s4 + $0x54] sm:$0xf]
    %v140 = vld [vmem:[%s4 + $0x58] sm:$0xf]
    %v141 = vld [vmem:[%s4 + $0x5c] sm:$0xf]
    %v142 = vld [vmem:[%s4 + $0x60] sm:$0xf]
    %v143 = vld [vmem:[%s4 + $0x64] sm:$0xf]
    %v144 = vld [vmem:[%s4 + $0x68] sm:$0xf]
    %v145 = vld [vmem:[%s4 + $0x6c] sm:$0xf]
    %v146 = vld [vmem:[%s4 + $0x70] sm:$0xf]
    %v147 = vld [vmem:[%s4 + $0x74] sm:$0xf]
    %v148 = vld [vmem:[%s4 + $0x78] sm:$0xf]
    %v149 = vld [vmem:[%s4 + $0x7c] sm:$0xf]
    %v150 = vld [vmem:[%s5] sm:$0x1]
    %v152 = vlaneseq
    %v153 = vshrl.u32 %v152, 7
    %v154 = vsub.s32 0, %v153
    %v155 = vrot.slane %v150, %v154
    %v189 = vunpack.c.l.b16 %v118
    %v190 = vunpack.c.l.b16 %v119
    %v191 = vunpack.c.l.b16 %v120
    %v192 = vunpack.c.l.b16 %v121
    %v193 = vunpack.c.l.b16 %v122
    %v194 = vunpack.c.l.b16 %v123
    %v195 = vunpack.c.l.b16 %v124
    %v196 = vunpack.c.l.b16 %v125
    %v197 = vunpack.c.l.b16 %v126
    %v198 = vunpack.c.l.b16 %v127
    %v199 = vunpack.c.l.b16 %v128
    %v200 = vunpack.c.l.b16 %v129
    %v201 = vunpack.c.l.b16 %v130
    %v202 = vunpack.c.l.b16 %v131
    %v203 = vunpack.c.l.b16 %v132
    %v204 = vunpack.c.l.b16 %v133
    %v205 = vunpack.c.l.b16 %v134
    %v206 = vunpack.c.l.b16 %v135
    %v207 = vunpack.c.l.b16 %v136
    %v208 = vunpack.c.l.b16 %v137
    %v209 = vunpack.c.l.b16 %v138
    %v210 = vunpack.c.l.b16 %v139
    %v211 = vunpack.c.l.b16 %v140
    %v212 = vunpack.c.l.b16 %v141
    %v213 = vunpack.c.l.b16 %v142
    %v214 = vunpack.c.l.b16 %v143
    %v215 = vunpack.c.l.b16 %v144
    %v216 = vunpack.c.l.b16 %v145
    %v217 = vunpack.c.l.b16 %v146
    %v218 = vunpack.c.l.b16 %v147
    %v219 = vunpack.c.l.b16 %v148
    %v220 = vunpack.c.l.b16 %v149
    %v221 = vpack.c.b16 %v190, %v189
    %v222 = vpack.c.b16 %v192, %v191
    %v223 = vpack.c.b16 %v194, %v193
    %v224 = vpack.c.b16 %v196, %v195
    %v225 = vpack.c.b16 %v198, %v197
    %v226 = vpack.c.b16 %v200, %v199
    %v227 = vpack.c.b16 %v202, %v201
    %v228 = vpack.c.b16 %v204, %v203
    %v229 = vpack.c.b16 %v206, %v205
    %v230 = vpack.c.b16 %v208, %v207
    %v231 = vpack.c.b16 %v210, %v209
    %v232 = vpack.c.b16 %v212, %v211
    %v233 = vpack.c.b16 %v214, %v213
    %v234 = vpack.c.b16 %v216, %v215
    %v235 = vpack.c.b16 %v218, %v217
    %v236 = vpack.c.b16 %v220, %v219
    %253 = vmatprep.subr.bf16.mxu0 0
    %254 = vmatpush1.bf16.msra.mxu0 %v221
    %255 = vmatprep.subr.bf16.mxu0 0
    %256 = vmatpush1.bf16.msra.mxu0 %v222
    %257 = vmatprep.subr.bf16.mxu0 0
    %258 = vmatpush1.bf16.msra.mxu0 %v223
    %259 = vmatprep.subr.bf16.mxu0 0
    %260 = vmatpush1.bf16.msra.mxu0 %v224
    %261 = vmatprep.subr.bf16.mxu0 0
    %262 = vmatpush1.bf16.msra.mxu0 %v225
    %263 = vmatprep.subr.bf16.mxu0 0
    %264 = vmatpush1.bf16.msra.mxu0 %v226
    %265 = vmatprep.subr.bf16.mxu0 0
    %266 = vmatpush1.bf16.msra.mxu0 %v227
    %267 = vmatprep.subr.bf16.mxu0 0
    %268 = vmatpush1.bf16.msra.mxu0 %v228
    %269 = vmatprep.subr.bf16.mxu0 0
    %270 = vmatpush1.bf16.msra.mxu0 %v229
    %271 = vmatprep.subr.bf16.mxu0 0
    %272 = vmatpush1.bf16.msra.mxu0 %v230
    %273 = vmatprep.subr.bf16.mxu0 0
    %274 = vmatpush1.bf16.msra.mxu0 %v231
    %275 = vmatprep.subr.bf16.mxu0 0
    %276 = vmatpush1.bf16.msra.mxu0 %v232
    %277 = vmatprep.subr.bf16.mxu0 0
    %278 = vmatpush1.bf16.msra.mxu0 %v233
    %279 = vmatprep.subr.bf16.mxu0 0
    %280 = vmatpush1.bf16.msra.mxu0 %v234
    %281 = vmatprep.subr.bf16.mxu0 0
    %282 = vmatpush1.bf16.msra.mxu0 %v235
    %283 = vmatprep.subr.bf16.mxu0 0
    %284 = vmatpush1.bf16.msra.mxu0 %v236
    %285 = vmatprep.mubr.bf16.mxu0 %v117
    %286 = vmatmul.mubr.bf16.gmra.mrb[0].mxu0 %v116
    %v287 = vpop.f32.mrb[0].mxu0
    %v288 = vadd.f32 %v155, %v287
    %v289 = vpop.f32.mrb[0].mxu0
    %v290 = vpop.f32.mrb[0].mxu0
    %v291 = vpop.f32.mrb[0].mxu0
    %292 = vdwg.mxu0
    %v293 = vtanh.pop %v288
    %v294 = vsub.f32 %v288, %v32
    %v295 = vmul.f32 %v294, %v294
    %v296 = vsub.f32 0.0, %v295
    %v297 = vsub.f32 0.0, %v293
    %v298 = vmul.f32 %v297, 1.442695
    %v299 = vpow.pop %v298
    %301 = vrot.lane.b32.xlu0 %v299, 96
    %v302 = vpop.permute.xlu0 %301
    %v304 = vmul.f32 %v296, %v302
    %306 = vrot.lane.b32.xlu0 %v293, 96
    %v307 = vpop.permute.xlu0 %306
    %v309 = vsub.f32 %v304, %v307
    %s310 = sld [smem:[#allocation2]]
    %v311 = vsel %vm69, %v309, 0.0
    %312 = vadd.xlane.f32.xlu0 %v311
    %v313 = vpop.xlane.xlu0 %312
    %v314 = vrot.slane %v313, 4
    %v315 = vadd.f32 %v313, %v314
    %v316 = vrot.slane %v315, 2
    %v317 = vadd.f32 %v315, %v316
    %v318 = vrot.slane %v317, 1
    %v319 = vadd.f32 %v317, %v318
    %s320 = vtos %v319
    %s321 = sadd.f32 %s310, %s320
    %s322 = scalar_lea.smem [#allocation2], 0
    %323 = sst [smem:[%s322]] %s321
    // Predicated region
    $region30: #{tpu_custom_call.1} parent=1 // pred_check
      %p324 = pneg %p25
    $region31: #{tpu_custom_call.1} parent=1 // pred_check_branch
      %326 = sbr.rel (%p324) target = $region33
    $region32: #{tpu_custom_call.1} parent=1 // pred_region
      %s327 = sld [smem:[#allocation2]]
      %s328 = ssub.f32 0.0, %s327
      %s329 = smul.f32 %s328, 0.125
      %s330 = scalar_lea.smem [#allocation3], 0
      %331 = sst [smem:[%s330]] %s329
    $region33: #{tpu_custom_call.1} parent=1 // pred_fallthru
      _
    // Predicated region
    $region34: #{tpu_custom_call.1} parent=1 // pred_check
      _
    $region35: #{tpu_custom_call.1} parent=1 // pred_check_branch
      %333 = sbr.rel (0) target = $region37
    $region36: #{tpu_custom_call.1} parent=1 // pred_region
      %s335 = ssub.s32 16, 16
      %336 = vsyncadd [#allocation4], %s335
      %339 = dma.smem_to_hbm [#allocation3], 16, %s6, [#allocation4]
    $region37: #{tpu_custom_call.1} parent=1 // pred_fallthru
      _
    // Predicated region
    $region38: #{tpu_custom_call.1} parent=1 // pred_check
      _
    $region39: #{tpu_custom_call.1} parent=1 // pred_check_branch
      %341 = sbr.rel (0) target = $region41
    $region40: #{tpu_custom_call.1} parent=1 // pred_region
      %342 = dma.done [#allocation4], 16
    $region41: #{tpu_custom_call.1} parent=1 // pred_fallthru
      _
    %343 = sfence
    %344 = vsyncpa [#allocation4], 1

</llo_original>
